<compile_context>
chip_gen: v5e
topology: v5e:2x2
jax: 0.10.0
libtpu: 0.0.40
codegen_flags: <defaults>
</compile_context>

<pallas_src>
import functools

import jax
import jax.numpy as jnp
from jax.experimental import pallas as pl
from jax.experimental.pallas import tpu as pltpu

BN_EPS = 1e-5


def _pool_embed_kernel(feat_ref, w_ref, out_ref):
    """One batch chunk: global sum-pool over HW, then (C, E) matmul.

    feat_ref: (TB, HW, C)  feature-map chunk, channels on the lane axis (f32 or bf16)
    w_ref   : (C, E)       embed weight (torch (E, C) transposed), pre-scaled by 1/HW
    out_ref : (TB, E) f32  pre-BatchNorm embeddings for this chunk
    """
    # The 1/HW scale is folded into w, so a plain sum suffices; accumulate in f32.
    pooled = jnp.sum(feat_ref[...].astype(jnp.float32), axis=1)              # (TB, C)
    out_ref[...] = jnp.dot(pooled, w_ref[...], preferred_element_type=jnp.float32)


def _batchnorm_kernel(emb_ref, gamma_ref, beta_ref, out_ref, *, valid_rows):
    """BatchNorm1d, training mode (biased batch stats) over the first `valid_rows` rows."""
    emb = emb_ref[...]                                                       # (Bp, E) f32
    n_rows = emb.shape[0]
    if valid_rows == n_rows:
        mu = jnp.mean(emb, axis=0, keepdims=True)
        centered = emb - mu
        var = jnp.mean(centered * centered, axis=0, keepdims=True)
    else:
        # Padded (zero) rows must not bias the batch statistics.
        rows = jax.lax.broadcasted_iota(jnp.int32, emb.shape, 0)
        mask = (rows < valid_rows).astype(jnp.float32)
        inv_n = 1.0 / float(valid_rows)
        mu = jnp.sum(emb * mask, axis=0, keepdims=True) * inv_n
        centered = emb - mu
        var = jnp.sum((centered * mask) ** 2, axis=0, keepdims=True) * inv_n
    norm = centered * jax.lax.rsqrt(var + BN_EPS)
    # NOTE: B == 1 yields output == beta, whereas torch raises in training mode.
    out_ref[...] = (norm * gamma_ref[...] + beta_ref[...]).astype(out_ref.dtype)


def _vmem_capacity_bytes():
    """Physical VMEM of the current TPU generation (128 MiB v5e/v6e, 64 MiB v7x)."""
    try:
        return int(pltpu.get_tpu_info().vmem_capacity_bytes)
    except Exception:  # conservative fallback = v7x size
        return 64 << 20


def _pick_batch_tile(b_pad, per_image_bytes, budget_bytes):
    """Largest multiple-of-8 tile dividing b_pad that fits the budget, preferring >= 2 steps."""
    cands = [tb for tb in range(b_pad, 7, -8) if b_pad % tb == 0]    # descending
    fitting = [tb for tb in cands if tb * per_image_bytes <= budget_bytes]
    if not fitting:
        return cands[-1]                                             # smallest (>= 8)
    multi_step = [tb for tb in fitting if b_pad // tb >= 2]
    return multi_step[0] if multi_step else fitting[0]


def encoder_cnn_forward(feat_nhwc, w, b, gamma, beta):
    """feat_nhwc: (B, H, W, C) backbone feature maps (f32 or bf16). Returns (B, E) f32.

    `b` (the Linear bias) is accepted for interface parity with the torch module but is
    mathematically cancelled by the training-mode BatchNorm mean subtraction, so it is not
    shipped to the kernel.  (If the BN were ever run in eval mode with running statistics,
    the bias would have to be added back.)
    """
    del b
    B, H, W, C = feat_nhwc.shape
    HW = H * W
    E = w.shape[1]

    # NHWC -> (B, HW, C) is a pure reshape (no HBM pass); channels stay on the lane axis.
    feat = feat_nhwc.reshape(B, HW, C)

    # Pad embed dim to a lane-dense multiple of 128 and batch to a sublane multiple of 8.
    E_pad = max(128, -(-E // 128) * 128)
    B_pad = max(8, -(-B // 8) * 8)
    if B_pad != B:
        # Corner case only (costs one HBM copy of feat); padded rows masked out of BN stats.
        feat = jnp.pad(feat, ((0, B_pad - B), (0, 0), (0, 0)))

    # Fold the 1/HW pooling scale into the embed weight; zero-pad to E_pad.
    w_scaled = w.astype(jnp.float32) * (1.0 / HW)
    if E_pad != E:
        w_scaled = jnp.pad(w_scaled, ((0, 0), (0, E_pad - E)))
    g2 = jnp.pad(gamma.reshape(1, E).astype(jnp.float32), ((0, 0), (0, E_pad - E)))
    bt2 = jnp.pad(beta.reshape(1, E).astype(jnp.float32), ((0, 0), (0, E_pad - E)))

    # ---- generation-aware VMEM budgeting ---------------------------------------------------
    itemsize = feat.dtype.itemsize
    cap = _vmem_capacity_bytes()
    usable = int(cap * 0.85) - (4 << 20)                # headroom for compiler-internal scratch
    fixed = 2 * C * E_pad * 4                           # double-buffered resident f32 weight
    per_image = (2 * HW * C * itemsize                  # double-buffered feat chunk
                 + (HW * C * 4 if itemsize < 4 else 0)  # possible f32 upcast temp (bf16 input)
                 + 2 * E_pad * 4)                       # double-buffered output rows
    tb = _pick_batch_tile(B_pad, per_image, max(usable - fixed, 8 << 20))
    nsteps = B_pad // tb
    vmem_limit = int(min(max(fixed + tb * per_image + (4 << 20), 32 << 20), cap - (8 << 20)))
    # TODO(synk): mark the grid-invariant weight block pipeline_mode=pl.Buffered(1) once
    # single-buffered blocks are verified on all target JAX versions (frees C*E*4 bytes VMEM).

    # ---- kernel 1: pool + matmul over a *parallel* batch-chunk grid (megacore-friendly) ----
    emb = pl.pallas_call(
        _pool_embed_kernel,
        out_shape=jax.ShapeDtypeStruct((B_pad, E_pad), jnp.float32),
        grid_spec=pltpu.PrefetchScalarGridSpec(
            num_scalar_prefetch=0,
            grid=(nsteps,),
            in_specs=[
                pl.BlockSpec((tb, HW, C), lambda i: (i, 0, 0)),   # batch-chunked feature maps
                pl.BlockSpec((C, E_pad), lambda i: (0, 0)),       # grid-invariant weight
            ],
            out_specs=pl.BlockSpec((tb, E_pad), lambda i: (i, 0)),
        ),
        compiler_params=pltpu.CompilerParams(
            dimension_semantics=("parallel",),
            vmem_limit_bytes=vmem_limit,
        ),
    )(feat, w_scaled)

    # ---- kernel 2: tiny whole-array BatchNorm1d (training-mode batch statistics) -----------
    out = pl.pallas_call(
        functools.partial(_batchnorm_kernel, valid_rows=B),
        out_shape=jax.ShapeDtypeStruct((B_pad, E_pad), jnp.float32),
    )(emb, g2, bt2)

    return out[:B, :E]


def encoder_cnn_forward_nchw(feat_nchw, w, b, gamma, beta):
    """Interface-parity shim for torch-layout (B, C, H, W) feature maps.

    Prefer the NHWC entry point: this transpose adds a full extra HBM pass over the
    feature maps (the single biggest cost flagged by the performance review).
    """
    return encoder_cnn_forward(jnp.transpose(feat_nchw, (0, 2, 3, 1)), w, b, gamma, beta)


def _reference(feat_nhwc, w, b, gamma, beta):
    B, H, W, C = feat_nhwc.shape
    pooled = jnp.mean(feat_nhwc.astype(jnp.float32).reshape(B, H * W, C), axis=1)
    emb = pooled @ w.astype(jnp.float32) + b
    mu = jnp.mean(emb, axis=0, keepdims=True)
    var = jnp.mean((emb - mu) ** 2, axis=0, keepdims=True)
    return (emb - mu) / jnp.sqrt(var + BN_EPS) * gamma + beta


if __name__ == "__main__":
    # Small, deterministic stand-ins for the production (B, 7, 7, 2048) / embed 256-512 shapes.
    key = jax.random.PRNGKey(0)

    # --- aligned shapes, f32 features --------------------------------------------------------
    B, H, W, C, E = 16, 4, 4, 256, 128
    k_feat, k_w, k_b, k_g, k_bt, key = jax.random.split(key, 6)
    feat = jax.random.normal(k_feat, (B, H, W, C), dtype=jnp.float32)
    w = jax.random.normal(k_w, (C, E), dtype=jnp.float32) * (1.0 / jnp.sqrt(C))
    b = jax.random.normal(k_b, (E,), dtype=jnp.float32) * 0.01
    gamma = 1.0 + 0.01 * jax.random.normal(k_g, (E,), dtype=jnp.float32)
    beta = 0.01 * jax.random.normal(k_bt, (E,), dtype=jnp.float32)

    out = jax.block_until_ready(encoder_cnn_forward(feat, w, b, gamma, beta))
    ref = _reference(feat, w, b, gamma, beta)
    assert out.shape == (B, E)
    assert jnp.allclose(out, ref, atol=1e-4, rtol=1e-4), "mismatch vs reference (f32, aligned)"

    # --- unaligned batch/embed, bf16 features (exercises padding + f32 accumulation) ---------
    B2, E2 = 10, 96
    k_feat2, k_w2, k_b2, k_g2, k_bt2, key = jax.random.split(key, 6)
    feat2 = jax.random.normal(k_feat2, (B2, H, W, C), dtype=jnp.float32).astype(jnp.bfloat16)
    w2 = jax.random.normal(k_w2, (C, E2), dtype=jnp.float32) * (1.0 / jnp.sqrt(C))
    b2 = jax.random.normal(k_b2, (E2,), dtype=jnp.float32) * 0.01
    gamma2 = 1.0 + 0.01 * jax.random.normal(k_g2, (E2,), dtype=jnp.float32)
    beta2 = 0.01 * jax.random.normal(k_bt2, (E2,), dtype=jnp.float32)

    out2 = jax.block_until_ready(encoder_cnn_forward(feat2, w2, b2, gamma2, beta2))
    ref2 = _reference(feat2, w2, b2, gamma2, beta2)
    assert out2.shape == (B2, E2)
    assert jnp.allclose(out2, ref2, atol=2e-3, rtol=2e-3), "mismatch vs reference (bf16, padded)"

    print("KERNEL_OK")
</pallas_src>

<mosaic_0001>
module attributes {stable_mosaic.version = 11 : i64} {
  func.func @_pool_embed_kernel(%arg0: i32, %arg1: memref<8x16x256xf32, #tpu.memory_space<vmem>>, %arg2: memref<256x128xf32, #tpu.memory_space<vmem>>, %arg3: memref<8x128xf32, #tpu.memory_space<vmem>>) attributes {dimension_semantics = [#tpu.dimension_semantics<parallel>], iteration_bounds = array<i64: 2>, scalar_prefetch = 0 : i64, scratch_operands = 0 : i64, tpu.core_type = #tpu.core_type<tc>, window_params = [{transform_indices = @transform_0, window_bounds = array<i64: 8, 16, 256>}, {pipeline_mode = #tpu.pipeline_mode<synchronous>, transform_indices = @transform_1, window_bounds = array<i64: 256, 128>}, {transform_indices = @transform_2, window_bounds = array<i64: 8, 128>}]} {
    %c0 = arith.constant 0 : index
    %c0_0 = arith.constant 0 : index
    %c0_1 = arith.constant 0 : index
    %0 = vector.load %arg1[%c0, %c0_0, %c0_1] : memref<8x16x256xf32, #tpu.memory_space<vmem>>, vector<8x16x256xf32>
    %cst = arith.constant dense<0.000000e+00> : vector<8x256xf32>
    %1 = vector.multi_reduction <add>, %0, %cst [1] : vector<8x16x256xf32> to vector<8x256xf32>
    %c0_2 = arith.constant 0 : index
    %c0_3 = arith.constant 0 : index
    %2 = vector.load %arg2[%c0_2, %c0_3] : memref<256x128xf32, #tpu.memory_space<vmem>>, vector<256x128xf32>
    %cst_4 = arith.constant dense<0.000000e+00> : vector<8x128xf32>
    %3 = tpu.matmul %1, %2, %cst_4 {dimension_numbers = #tpu.dot_dimension_numbers<[1], [0], [0], [1], [0, 0, 1, 1], [], []>} : vector<8x256xf32>, vector<256x128xf32>, vector<8x128xf32> -> vector<8x128xf32>
    %c0_5 = arith.constant 0 : index
    %c0_6 = arith.constant 0 : index
    %4 = vector.load %arg3[%c0_5, %c0_6] : memref<8x128xf32, #tpu.memory_space<vmem>>, vector<8x128xf32>
    tpu.vector_store %arg3[%c0_5, %c0_6], %3 {strides = array<i32>} : memref<8x128xf32, #tpu.memory_space<vmem>>, vector<8x128xf32>,
    return
  }
  func.func @transform_0(%arg0: i32) -> (i32, i32, i32) {
    %c0_i32 = arith.constant 0 : i32
    %c0_i32_0 = arith.constant 0 : i32
    %c0_i32_1 = arith.constant 0 : i32
    return %arg0, %c0_i32, %c0_i32_0 : i32, i32, i32
  }
  func.func @transform_1(%arg0: i32) -> (i32, i32) {
    %c0_i32 = arith.constant 0 : i32
    %c0_i32_0 = arith.constant 0 : i32
    %c0_i32_1 = arith.constant 0 : i32
    return %c0_i32, %c0_i32_0 : i32, i32
  }
  func.func @transform_2(%arg0: i32) -> (i32, i32) {
    %c0_i32 = arith.constant 0 : i32
    %c0_i32_0 = arith.constant 0 : i32
    return %arg0, %c0_i32 : i32, i32
  }
}

</mosaic_0001>

<llo_original>
// kernel: tpu_custom_call.1
$region0: #{tpu_custom_call.1}
  #allocation0 [shape = 'u32[]', space=smem, size = 0x4, offset = 0x4, fixed_abs, tag = 'smem constant byte address 0x4 - core index']
  #allocation1 [shape = 'u32[72,128]{1,0:T(1,128)}', space=vmem, size = 0x9000, scoped, tag = 'internal scratch']
  %s0 = inlined_call_operand.hbm [shape: f32[16,16,256], index: 0, kind: input, shape index: {}]
  %s1 = inlined_call_operand.hbm [shape: f32[256,128], index: 1, kind: input, shape index: {}]
  %s2 = inlined_call_operand.hbm [shape: f32[16,128], index: 2, kind: output, shape index: {}]
  %s3 = sld [smem:[#allocation0]]
  $region49: #{tpu_custom_call.1} parent=0
    _
  %s5 = ssub.s32 1, %s3
  %s6 = scalar_select 0, %s5, %s3
  $region1: #{tpu_custom_call.1} parent=0
    #allocation2 [shape = 'u8[262144]{0}', space=vmem, size = 0x40000, scoped, tag = 'input window, operand 0']
    #allocation3 [shape = 's32[2]{0}', space=sflag, size = 0x8, scoped, tag = 'scoped memory for tpu_custom_call.1']
    #allocation4 [shape = 's32[2]{0}', space=sflag, size = 0x8, scoped, tag = 'scoped memory for tpu_custom_call.1']
    #allocation5 [shape = 'u8[131072]{0}', space=vmem, size = 0x20000, scoped, tag = 'input window, operand 1, single buffered']
    #allocation6 [shape = 's32[1]{0}', space=sflag, size = 0x4, scoped, tag = 'scoped memory for tpu_custom_call.1']
    #allocation7 [shape = 'u8[8192]{0}', space=vmem, size = 0x2000, scoped, tag = 'output window, operand 0']
    %7 = vsyncpa [#allocation3], 0
    %s8 = scalar_lea.sflag [#allocation3], 1
    %9 = vsyncpa %s8, 0
    %10 = vsyncpa [#allocation6], 0
    %11 = vsyncpa [#allocation4], 0
    %s12 = scalar_lea.sflag [#allocation4], 1
    %13 = vsyncpa %s12, 0
    loop: start=0, step=1, limit=4
    $region2: #{tpu_custom_call.1} parent=1 // loop_pre_header
      _
    $region3: #{tpu_custom_call.1} parent=1 // loop_header
      %s15 = sphi 0, %s19
      %p16 = scmp.ge.s32.totalorder %s15, 4
      %s25 = sphi 0, %s27
      %s28 = sphi 0, %s25
      %s29 = sphi 0, %s28
      %s45 = sphi 0, %s29
      %s49 = sphi 0, %s49
      %s51 = sphi 0, %s49
      %s52 = sphi 0, %s51
      %s66 = sphi 0, %s52
      %s72 = sphi 0, %s74
      %s75 = sphi 0, %s72
      %s76 = sphi 0, %s75
      %s92 = sphi 0, %s76
    $region4: #{tpu_custom_call.1} parent=1 // loop_header_branch
      %18 = sbr.rel (%p16) target = $region8
    $region5: #{tpu_custom_call.1} parent=1 // loop_body
      %s20 = ssub.s32 %s15, 1
      %s21 = ssub.s32 %s15, 2
      %s22 = sadd.s32 %s15, 1
      %s23 = ssub.s32 %s15, %s22
      %p24 = scmp.eq.s32.totalorder %s23, 0
      %s26 = sadd.s32 %s25, 1
      %s27 = scalar_select %p24, %s25, %s26
      %p30 = pneg %p24
      %p31 = scmp.eq.s32.totalorder %s15, 1
      %p32 = por %p30, %p31
      %p33 = scmp.ne.s32.totalorder %s25, %s28
      %p34 = scmp.eq.s32.totalorder %s15, 0
      %p35 = por %p33, %p34
      %p36 = scmp.ne.s32.totalorder %s25, %s28
      %p37 = scmp.eq.s32.totalorder %s20, 1
      %p38 = por %p36, %p37
      %p39 = scmp.ne.s32.totalorder %s28, %s29
      %p40 = scmp.eq.s32.totalorder %s20, 0
      %p41 = por %p39, %p40
      %p42 = scmp.ne.s32.totalorder %s28, %s29
      %p43 = scmp.eq.s32.totalorder %s21, 1
      %p44 = por %p42, %p43
      %p46 = scmp.ne.s32.totalorder %s29, %s45
      %p47 = scmp.eq.s32.totalorder %s21, 0
      %p48 = por %p46, %p47
      %s50 = sadd.s32 %s49, 1
      %p53 = scmp.eq.s32.totalorder %s15, 1
      %p54 = scmp.ne.s32.totalorder %s49, %s51
      %p55 = scmp.eq.s32.totalorder %s15, 0
      %p56 = por %p54, %p55
      %p57 = scmp.ne.s32.totalorder %s49, %s51
      %p58 = scmp.eq.s32.totalorder %s20, 1
      %p59 = por %p57, %p58
      %p60 = scmp.ne.s32.totalorder %s51, %s52
      %p61 = scmp.eq.s32.totalorder %s20, 0
      %p62 = por %p60, %p61
      %p63 = scmp.ne.s32.totalorder %s51, %s52
      %p64 = scmp.eq.s32.totalorder %s21, 1
      %p65 = por %p63, %p64
      %p67 = scmp.ne.s32.totalorder %s52, %s66
      %p68 = scmp.eq.s32.totalorder %s21, 0
      %p69 = por %p67, %p68
      %s70 = ssub.s32 %s15, %s22
      %p71 = scmp.eq.s32.totalorder %s70, 0
      %s73 = sadd.s32 %s72, 1
      %s74 = scalar_select %p71, %s72, %s73
      %p77 = pneg %p71
      %p78 = scmp.eq.s32.totalorder %s15, 1
      %p79 = por %p77, %p78
      %p80 = scmp.ne.s32.totalorder %s72, %s75
      %p81 = scmp.eq.s32.totalorder %s15, 0
      %p82 = por %p80, %p81
      %p83 = scmp.ne.s32.totalorder %s72, %s75
      %p84 = scmp.eq.s32.totalorder %s20, 1
      %p85 = por %p83, %p84
      %p86 = scmp.ne.s32.totalorder %s75, %s76
      %p87 = scmp.eq.s32.totalorder %s20, 0
      %p88 = por %p86, %p87
      %p89 = scmp.ne.s32.totalorder %s75, %s76
      %p90 = scmp.eq.s32.totalorder %s21, 1
      %p91 = por %p89, %p90
      %p93 = scmp.ne.s32.totalorder %s76, %s92
      %p94 = scmp.eq.s32.totalorder %s21, 0
      %p95 = por %p93, %p94
      %p96 = scmp.le.s32.totalorder 1, %s15
      %p97 = scmp.lt.s32.totalorder %s15, 3
      %p98 = pnand %p96, %p97
      %p99 = pneg %p98
      // Predicated region
      $region9: #{tpu_custom_call.1} parent=5 // pred_check
        _
      $region10: #{tpu_custom_call.1} parent=5 // pred_check_branch
        %101 = sbr.rel (%p98) target = $region12
      $region11: #{tpu_custom_call.1} parent=5 // pred_region
        %s102 = ssub.s32 %s15, 1
        // Predicated region
        $region13: #{tpu_custom_call.1} parent=11 // pred_check
          %p103 = pneg %p62
        $region14: #{tpu_custom_call.1} parent=11 // pred_check_branch
          %105 = sbr.rel (%p103) target = $region16
        $region15: #{tpu_custom_call.1} parent=11 // pred_region
          %107 = vsyncadd [#allocation6], 0
          %s108 = sshll.u32 %s1, 4
          %s109 = int_to_ptr.hbm [resolvable:$true] %s108
          %s110 = sshll.u32 [#allocation5], 4
          %s111 = int_to_ptr.vmem [resolvable:$true] %s110
          %116 = dma.hbm_to_vmem [thread:$0]  %s109, 4096, %s111, [#allocation6], 128, 128, 8
        $region16: #{tpu_custom_call.1} parent=11 // pred_fallthru
          _
      $region12: #{tpu_custom_call.1} parent=5 // pred_fallthru
        _
      %p117 = scmp.lt.s32.totalorder %s15, 2
      // Predicated region
      $region17: #{tpu_custom_call.1} parent=5 // pred_check
        %p118 = pneg %p117
      $region18: #{tpu_custom_call.1} parent=5 // pred_check_branch
        %120 = sbr.rel (%p118) target = $region20
      $region19: #{tpu_custom_call.1} parent=5 // pred_region
        // Predicated region
        $region21: #{tpu_custom_call.1} parent=19 // pred_check
          %p121 = pneg %p35
        $region22: #{tpu_custom_call.1} parent=19 // pred_check_branch
          %123 = sbr.rel (%p121) target = $region24
        $region23: #{tpu_custom_call.1} parent=19 // pred_region
          %s124 = sand.u32 %s25, 1
          %s125 = scalar_lea.sflag [#allocation3], %s124
          %s126 = sand.u32 %s25, 1
          %s127 = smul.addr %s126, 256
          %s128 = scalar_lea.vmem [#allocation2], %s127
          %s129 = smul.u32 8, %s15
          %131 = vsyncadd %s125, 0
          %s132 = smul.addr %s129, 4
          %s133 = smul.addr %s132, 8
          %s134 = scalar_lea.hbm %s0, %s133
          %s135 = sshll.u32 %s134, 4
          %s136 = int_to_ptr.hbm [resolvable:$true] %s135
          %s137 = sshll.u32 %s128, 4
          %s138 = int_to_ptr.vmem [resolvable:$true] %s137
          %143 = dma.hbm_to_vmem [thread:$0]  %s136, 4096, %s138, %s125, 256, 256, 16
        $region24: #{tpu_custom_call.1} parent=19 // pred_fallthru
          _
      $region20: #{tpu_custom_call.1} parent=5 // pred_fallthru
        _
      %p144 = scmp.le.s32.totalorder 1, %s15
      %p145 = scmp.lt.s32.totalorder %s15, 3
      %p146 = pnand %p144, %p145
      %p147 = pneg %p146
      // Predicated region
      $region25: #{tpu_custom_call.1} parent=5 // pred_check
        _
      $region26: #{tpu_custom_call.1} parent=5 // pred_check_branch
        %149 = sbr.rel (%p146) target = $region28
      $region27: #{tpu_custom_call.1} parent=5 // pred_region
        %s150 = ssub.s32 %s15, 1
        %s151 = sand.u32 %s28, 1
        %s152 = scalar_lea.sflag [#allocation3], %s151
        %s153 = sand.u32 %s28, 1
        %s154 = smul.addr %s153, 256
        %s155 = scalar_lea.vmem [#allocation2], %s154
        // Predicated region
        $region29: #{tpu_custom_call.1} parent=27 // pred_check
          %p156 = pneg %p41
        $region30: #{tpu_custom_call.1} parent=27 // pred_check_branch
          %158 = sbr.rel (%p156) target = $region32
        $region31: #{tpu_custom_call.1} parent=27 // pred_region
          %160 = dma.done %s152, 4096
        $region32: #{tpu_custom_call.1} parent=27 // pred_fallthru
          _
        // Predicated region
        $region33: #{tpu_custom_call.1} parent=27 // pred_check
          %p161 = pneg %p62
        $region34: #{tpu_custom_call.1} parent=27 // pred_check_branch
          %163 = sbr.rel (%p161) target = $region36
        $region35: #{tpu_custom_call.1} parent=27 // pred_region
          %165 = dma.done [#allocation6], 4096
        $region36: #{tpu_custom_call.1} parent=27 // pred_fallthru
          _
        %s166 = sand.u32 %s28, 1
        %s167 = scalar_lea.sflag [#allocation3], %s166
        %s168 = sand.u32 %s28, 1
        %s169 = smul.addr %s168, 256
        %s170 = scalar_lea.vmem [#allocation2], %s169
        %p171 = pneg %p41
        %p172 = pneg %p38
        %p173 = pneg %p62
        %p174 = pneg %p59
        %p175 = pneg %p88
        %p176 = pneg %p85
        %s177 = sand.u32 %s75, 1
        %s178 = scalar_lea.sflag [#allocation4], %s177
        %s179 = sand.u32 %s75, 1
        %s180 = smul.addr %s179, 8
        %s181 = scalar_lea.vmem [#allocation7], %s180
        %s182 = smul.u32 8, %s20
        %v183 = vld [vmem:[%s155] sm:$0xff]
        %v184 = vld [vmem:[%s155 + $0x8] sm:$0xff]
        %v185 = vld [vmem:[%s155 + $0x10] sm:$0xff]
        %v186 = vld [vmem:[%s155 + $0x18] sm:$0xff]
        %v187 = vld [vmem:[%s155 + $0x20] sm:$0xff]
        %v188 = vld [vmem:[%s155 + $0x28] sm:$0xff]
        %v189 = vld [vmem:[%s155 + $0x30] sm:$0xff]
        %v190 = vld [vmem:[%s155 + $0x38] sm:$0xff]
        %v191 = vld [vmem:[%s155 + $0x40] sm:$0xff]
        %v192 = vld [vmem:[%s155 + $0x48] sm:$0xff]
        %v193 = vld [vmem:[%s155 + $0x50] sm:$0xff]
        %v194 = vld [vmem:[%s155 + $0x58] sm:$0xff]
        %v195 = vld [vmem:[%s155 + $0x60] sm:$0xff]
        %v196 = vld [vmem:[%s155 + $0x68] sm:$0xff]
        %v197 = vld [vmem:[%s155 + $0x70] sm:$0xff]
        %v198 = vld [vmem:[%s155 + $0x78] sm:$0xff]
        %v199 = vld [vmem:[%s155 + $0x80] sm:$0xff]
        %v200 = vld [vmem:[%s155 + $0x88] sm:$0xff]
        %v201 = vld [vmem:[%s155 + $0x90] sm:$0xff]
        %v202 = vld [vmem:[%s155 + $0x98] sm:$0xff]
        %v203 = vld [vmem:[%s155 + $0xa0] sm:$0xff]
        %v204 = vld [vmem:[%s155 + $0xa8] sm:$0xff]
        %v205 = vld [vmem:[%s155 + $0xb0] sm:$0xff]
        %v206 = vld [vmem:[%s155 + $0xb8] sm:$0xff]
        %v207 = vld [vmem:[%s155 + $0xc0] sm:$0xff]
        %v208 = vld [vmem:[%s155 + $0xc8] sm:$0xff]
        %v209 = vld [vmem:[%s155 + $0xd0] sm:$0xff]
        %v210 = vld [vmem:[%s155 + $0xd8] sm:$0xff]
        %v211 = vld [vmem:[%s155 + $0xe0] sm:$0xff]
        %v212 = vld [vmem:[%s155 + $0xe8] sm:$0xff]
        %v213 = vld [vmem:[%s155 + $0xf0] sm:$0xff]
        %v214 = vld [vmem:[%s155 + $0xf8] sm:$0xff]
        %v215 = vadd.f32 %v183, %v185
        %v216 = vrot.slane %v215, 4
        %v217 = vadd.f32 %v215, %v216
        %v218 = vrot.slane %v217, 2
        %v219 = vadd.f32 %v217, %v218
        %v220 = vrot.slane %v219, 1
        %v221 = vadd.f32 %v219, %v220
        %v222 = vadd.f32 %v184, %v186
        %v223 = vrot.slane %v222, 4
        %v224 = vadd.f32 %v222, %v223
        %v225 = vrot.slane %v224, 2
        %v226 = vadd.f32 %v224, %v225
        %v227 = vrot.slane %v226, 1
        %v228 = vadd.f32 %v226, %v227
        %v229 = vadd.f32 %v187, %v189
        %v230 = vrot.slane %v229, 4
        %v231 = vadd.f32 %v229, %v230
        %v232 = vrot.slane %v231, 2
        %v233 = vadd.f32 %v231, %v232
        %v234 = vrot.slane %v233, 1
        %v235 = vadd.f32 %v233, %v234
        %v236 = vadd.f32 %v188, %v190
        %v237 = vrot.slane %v236, 4
        %v238 = vadd.f32 %v236, %v237
        %v239 = vrot.slane %v238, 2
        %v240 = vadd.f32 %v238, %v239
        %v241 = vrot.slane %v240, 1
        %v242 = vadd.f32 %v240, %v241
        %v243 = vadd.f32 %v191, %v193
        %v244 = vrot.slane %v243, 4
        %v245 = vadd.f32 %v243, %v244
        %v246 = vrot.slane %v245, 2
        %v247 = vadd.f32 %v245, %v246
        %v248 = vrot.slane %v247, 1
        %v249 = vadd.f32 %v247, %v248
        %v250 = vadd.f32 %v192, %v194
        %v251 = vrot.slane %v250, 4
        %v252 = vadd.f32 %v250, %v251
        %v253 = vrot.slane %v252, 2
        %v254 = vadd.f32 %v252, %v253
        %v255 = vrot.slane %v254, 1
        %v256 = vadd.f32 %v254, %v255
        %v257 = vadd.f32 %v195, %v197
        %v258 = vrot.slane %v257, 4
        %v259 = vadd.f32 %v257, %v258
        %v260 = vrot.slane %v259, 2
        %v261 = vadd.f32 %v259, %v260
        %v262 = vrot.slane %v261, 1
        %v263 = vadd.f32 %v261, %v262
        %v264 = vadd.f32 %v196, %v198
        %v265 = vrot.slane %v264, 4
        %v266 = vadd.f32 %v264, %v265
        %v267 = vrot.slane %v266, 2
        %v268 = vadd.f32 %v266, %v267
        %v269 = vrot.slane %v268, 1
        %v270 = vadd.f32 %v268, %v269
        %v271 = vadd.f32 %v199, %v201
        %v272 = vrot.slane %v271, 4
        %v273 = vadd.f32 %v271, %v272
        %v274 = vrot.slane %v273, 2
        %v275 = vadd.f32 %v273, %v274
        %v276 = vrot.slane %v275, 1
        %v277 = vadd.f32 %v275, %v276
        %v278 = vadd.f32 %v200, %v202
        %v279 = vrot.slane %v278, 4
        %v280 = vadd.f32 %v278, %v279
        %v281 = vrot.slane %v280, 2
        %v282 = vadd.f32 %v280, %v281
        %v283 = vrot.slane %v282, 1
        %v284 = vadd.f32 %v282, %v283
        %v285 = vadd.f32 %v203, %v205
        %v286 = vrot.slane %v285, 4
        %v287 = vadd.f32 %v285, %v286
        %v288 = vrot.slane %v287, 2
        %v289 = vadd.f32 %v287, %v288
        %v290 = vrot.slane %v289, 1
        %v291 = vadd.f32 %v289, %v290
        %v292 = vadd.f32 %v204, %v206
        %v293 = vrot.slane %v292, 4
        %v294 = vadd.f32 %v292, %v293
        %v295 = vrot.slane %v294, 2
        %v296 = vadd.f32 %v294, %v295
        %v297 = vrot.slane %v296, 1
        %v298 = vadd.f32 %v296, %v297
        %v299 = vadd.f32 %v207, %v209
        %v300 = vrot.slane %v299, 4
        %v301 = vadd.f32 %v299, %v300
        %v302 = vrot.slane %v301, 2
        %v303 = vadd.f32 %v301, %v302
        %v304 = vrot.slane %v303, 1
        %v305 = vadd.f32 %v303, %v304
        %v306 = vadd.f32 %v208, %v210
        %v307 = vrot.slane %v306, 4
        %v308 = vadd.f32 %v306, %v307
        %v309 = vrot.slane %v308, 2
        %v310 = vadd.f32 %v308, %v309
        %v311 = vrot.slane %v310, 1
        %v312 = vadd.f32 %v310, %v311
        %v313 = vadd.f32 %v211, %v213
        %v314 = vrot.slane %v313, 4
        %v315 = vadd.f32 %v313, %v314
        %v316 = vrot.slane %v315, 2
        %v317 = vadd.f32 %v315, %v316
        %v318 = vrot.slane %v317, 1
        %v319 = vadd.f32 %v317, %v318
        %v320 = vadd.f32 %v212, %v214
        %v321 = vrot.slane %v320, 4
        %v322 = vadd.f32 %v320, %v321
        %v323 = vrot.slane %v322, 2
        %v324 = vadd.f32 %v322, %v323
        %v325 = vrot.slane %v324, 1
        %v326 = vadd.f32 %v324, %v325
        %v327 = vld [vmem:[#allocation5] sm:$0xff]
        %v328 = vld [vmem:[#allocation5 + $0x8] sm:$0xff]
        %v329 = vld [vmem:[#allocation5 + $0x10] sm:$0xff]
        %v330 = vld [vmem:[#allocation5 + $0x18] sm:$0xff]
        %v331 = vld [vmem:[#allocation5 + $0x20] sm:$0xff]
        %v332 = vld [vmem:[#allocation5 + $0x28] sm:$0xff]
        %v333 = vld [vmem:[#allocation5 + $0x30] sm:$0xff]
        %v334 = vld [vmem:[#allocation5 + $0x38] sm:$0xff]
        %v335 = vld [vmem:[#allocation5 + $0x40] sm:$0xff]
        %v336 = vld [vmem:[#allocation5 + $0x48] sm:$0xff]
        %v337 = vld [vmem:[#allocation5 + $0x50] sm:$0xff]
        %v338 = vld [vmem:[#allocation5 + $0x58] sm:$0xff]
        %v339 = vld [vmem:[#allocation5 + $0x60] sm:$0xff]
        %v340 = vld [vmem:[#allocation5 + $0x68] sm:$0xff]
        %v341 = vld [vmem:[#allocation5 + $0x70] sm:$0xff]
        %v342 = vld [vmem:[#allocation5 + $0x78] sm:$0xff]
        %v343 = vld [vmem:[#allocation5 + $0x80] sm:$0xff]
        %v344 = vld [vmem:[#allocation5 + $0x88] sm:$0xff]
        %v345 = vld [vmem:[#allocation5 + $0x90] sm:$0xff]
        %v346 = vld [vmem:[#allocation5 + $0x98] sm:$0xff]
        %v347 = vld [vmem:[#allocation5 + $0xa0] sm:$0xff]
        %v348 = vld [vmem:[#allocation5 + $0xa8] sm:$0xff]
        %v349 = vld [vmem:[#allocation5 + $0xb0] sm:$0xff]
        %v350 = vld [vmem:[#allocation5 + $0xb8] sm:$0xff]
        %v351 = vld [vmem:[#allocation5 + $0xc0] sm:$0xff]
        %v352 = vld [vmem:[#allocation5 + $0xc8] sm:$0xff]
        %v353 = vld [vmem:[#allocation5 + $0xd0] sm:$0xff]
        %v354 = vld [vmem:[#allocation5 + $0xd8] sm:$0xff]
        %v355 = vld [vmem:[#allocation5 + $0xe0] sm:$0xff]
        %v356 = vld [vmem:[#allocation5 + $0xe8] sm:$0xff]
        %v357 = vld [vmem:[#allocation5 + $0xf0] sm:$0xff]
        %v358 = vld [vmem:[#allocation5 + $0xf8] sm:$0xff]
        %vm375 = vcmask 1041409
        %v376 = vsel %vm375, %v235, %v221
        %vm377 = vcmask 1042434
        %v378 = vsel %vm377, %v249, %v376
        %vm379 = vcmask 1043459
        %v380 = vsel %vm379, %v263, %v378
        %vm381 = vcmask 1044484
        %v382 = vsel %vm381, %v277, %v380
        %vm383 = vcmask 1045509
        %v384 = vsel %vm383, %v291, %v382
        %vm385 = vcmask 1046534
        %v386 = vsel %vm385, %v305, %v384
        %vm387 = vcmask 1047559
        %v388 = vsel %vm387, %v319, %v386
        %v389 = vsel %vm375, %v242, %v228
        %v390 = vsel %vm377, %v256, %v389
        %v391 = vsel %vm379, %v270, %v390
        %v392 = vsel %vm381, %v284, %v391
        %v393 = vsel %vm383, %v298, %v392
        %v394 = vsel %vm385, %v312, %v393
        %v395 = vsel %vm387, %v326, %v394
        %398 = vmatpush.msra.mxu0 %v342
        %399 = vmatpush.msra.mxu0 %v341
        %400 = vmatpush.msra.mxu0 %v340
        %401 = vmatpush.msra.mxu0 %v339
        %402 = vmatpush.msra.mxu0 %v338
        %403 = vmatpush.msra.mxu0 %v337
        %404 = vmatpush.msra.mxu0 %v336
        %405 = vmatpush.msra.mxu0 %v335
        %406 = vmatpush.msra.mxu0 %v334
        %407 = vmatpush.msra.mxu0 %v333
        %408 = vmatpush.msra.mxu0 %v332
        %409 = vmatpush.msra.mxu0 %v331
        %410 = vmatpush.msra.mxu0 %v330
        %411 = vmatpush.msra.mxu0 %v329
        %412 = vmatpush.msra.mxu0 %v328
        %413 = vmatpush.msra.mxu0 %v327
        %414 = vmatmul.f32.gmra.mxu0 %v388
        %v415 = vpop.f32.mrf.mxu0
        %v416 = vadd.f32 0.0, %v415
        %417 = vdwg.mxu0
        %418 = vmatpush.msra.mxu0 %v358
        %419 = vmatpush.msra.mxu0 %v357
        %420 = vmatpush.msra.mxu0 %v356
        %421 = vmatpush.msra.mxu0 %v355
        %422 = vmatpush.msra.mxu0 %v354
        %423 = vmatpush.msra.mxu0 %v353
        %424 = vmatpush.msra.mxu0 %v352
        %425 = vmatpush.msra.mxu0 %v351
        %426 = vmatpush.msra.mxu0 %v350
        %427 = vmatpush.msra.mxu0 %v349
        %428 = vmatpush.msra.mxu0 %v348
        %429 = vmatpush.msra.mxu0 %v347
        %430 = vmatpush.msra.mxu0 %v346
        %431 = vmatpush.msra.mxu0 %v345
        %432 = vmatpush.msra.mxu0 %v344
        %433 = vmatpush.msra.mxu0 %v343
        %434 = vmatmul.f32.gmra.mxu0 %v395
        %v435 = vpop.f32.mrf.mxu0
        %v436 = vadd.f32 %v416, %v435
        %437 = vdwg.mxu0
        %438 = vst [vmem:[%s181] sm:$0xff] %v436
        %s439 = sand.u32 %s75, 1
        %s440 = scalar_lea.sflag [#allocation4], %s439
        %s441 = sand.u32 %s75, 1
        %s442 = smul.addr %s441, 8
        %s443 = scalar_lea.vmem [#allocation7], %s442
        // Predicated region
        $region37: #{tpu_custom_call.1} parent=27 // pred_check
          %p444 = pneg %p85
        $region38: #{tpu_custom_call.1} parent=27 // pred_check_branch
          %446 = sbr.rel (%p444) target = $region40
        $region39: #{tpu_custom_call.1} parent=27 // pred_region
          %448 = vsyncadd %s440, 0
          %s449 = smul.addr %s20, 8
          %s450 = scalar_lea.hbm %s2, %s449
          %s452 = sshll.u32 %s443, 4
          %s453 = int_to_ptr.vmem [resolvable:$true] %s452
          %s454 = sshll.u32 %s450, 4
          %s455 = int_to_ptr.hbm [resolvable:$true] %s454
          %457 = dma.vmem_to_hbm [thread:$0]  %s453, 128, %s455, %s440
        $region40: #{tpu_custom_call.1} parent=27 // pred_fallthru
          _
      $region28: #{tpu_custom_call.1} parent=5 // pred_fallthru
        _
      %p458 = scmp.le.s32.totalorder 2, %s15
      // Predicated region
      $region41: #{tpu_custom_call.1} parent=5 // pred_check
        %p459 = pneg %p458
      $region42: #{tpu_custom_call.1} parent=5 // pred_check_branch
        %461 = sbr.rel (%p459) target = $region44
      $region43: #{tpu_custom_call.1} parent=5 // pred_region
        %s462 = ssub.s32 %s15, 2
        // Predicated region
        $region45: #{tpu_custom_call.1} parent=43 // pred_check
          %p463 = pneg %p91
        $region46: #{tpu_custom_call.1} parent=43 // pred_check_branch
          %465 = sbr.rel (%p463) target = $region48
        $region47: #{tpu_custom_call.1} parent=43 // pred_region
          %s466 = sand.u32 %s76, 1
          %s467 = scalar_lea.sflag [#allocation4], %s466
          %s468 = sand.u32 %s76, 1
          %s469 = smul.addr %s468, 8
          %s470 = scalar_lea.vmem [#allocation7], %s469
          %472 = dma.done %s467, 128
        $region48: #{tpu_custom_call.1} parent=43 // pred_fallthru
          _
      $region44: #{tpu_custom_call.1} parent=5 // pred_fallthru
        _
    $region6: #{tpu_custom_call.1} parent=1 // loop_footer
      %s19 = sadd.s32 1, %s15
    $region7: #{tpu_custom_call.1} parent=1 // loop_footer_branch
      %14 = sbr.rel target = $region3
    $region8: #{tpu_custom_call.1} parent=1 // loop_exit
      _
    %473 = vsyncpa [#allocation3], 1
    %s474 = scalar_lea.sflag [#allocation3], 1
    %475 = vsyncpa %s474, 1
    %476 = vsyncpa [#allocation6], 1
    %477 = vsyncpa [#allocation4], 1
    %s478 = scalar_lea.sflag [#allocation4], 1
    %479 = vsyncpa %s478, 1

</llo_original>
